<compile_context>
chip_gen: v7x
topology: tpu7x:2x2x1
jax: 0.10.0
libtpu: 0.0.40
codegen_flags: <defaults>
</compile_context>

<pallas_src>
import jax
import jax.numpy as jnp
from jax.experimental import pallas as pl
from jax.experimental.pallas import tpu as pltpu


_TARGET_CHUNK_BYTES = 8 << 20   # aim for ~8 MiB per outstanding DMA
_MAX_DMA_CHUNKS = 8             # cap on outstanding DMAs / semaphores


def _plan_chunks(leading, total_bytes):
    """Split the leading axis into a few near-even contiguous chunks.

    Returns a list of (start, size) Python ints (static at trace time).
    Small arrays, or arrays with a size-1 leading axis, use one whole-array
    DMA so tiny copies carry no per-chunk overhead.
    """
    if leading <= 1 or total_bytes <= _TARGET_CHUNK_BYTES:
        return [(0, leading)]
    want = -(-total_bytes // _TARGET_CHUNK_BYTES)          # ceil division
    n = max(1, min(_MAX_DMA_CHUNKS, leading, want))
    base, rem = divmod(leading, n)
    chunks, start = [], 0
    for i in range(n):
        sz = base + (1 if i < rem else 0)
        chunks.append((start, sz))
        start += sz
    return chunks


def _make_dma_identity_kernel(chunks):
    """Build a kernel that issues one HBM->HBM async copy per chunk."""

    def kernel(x_ref, o_ref, sems):
        # x_ref / o_ref are raw HBM refs (memory_space=pl.ANY); no VMEM staging.
        copies = []
        for i, (start, size) in enumerate(chunks):
            cp = pltpu.make_async_copy(
                x_ref.at[pl.ds(start, size)],       # contiguous HBM region
                o_ref.at[pl.ds(start, size)],
                sems.at[i],
            )
            cp.start()
            copies.append(cp)
        # All chunks are in flight concurrently; now drain them.
        for cp in copies:
            cp.wait()

    return kernel


def pallas_identity_copy(x):
    """Identity copy executed entirely by the DMA engines (HBM -> HBM)."""
    if x.ndim == 0:
        return pallas_identity_copy(x.reshape(1)).reshape(())

    nbytes = int(x.size) * x.dtype.itemsize
    chunks = _plan_chunks(int(x.shape[0]), nbytes)

    return pl.pallas_call(
        _make_dma_identity_kernel(chunks),
        out_shape=jax.ShapeDtypeStruct(x.shape, x.dtype),
        in_specs=[pl.BlockSpec(memory_space=pl.ANY)],     # stay in HBM
        out_specs=pl.BlockSpec(memory_space=pl.ANY),      # stay in HBM
        scratch_shapes=[pltpu.SemaphoreType.DMA((len(chunks),))],
        cost_estimate=pl.CostEstimate(
            flops=0, transcendentals=0, bytes_accessed=2 * nbytes),
    )(x)


class BaseModel:
    """JAX/Pallas mirror of feamgan's BaseModel bookkeeping + identity forward."""

    def __init__(self, model_config, dataset_config, input_shape, output_shape,
                 sequence_length):
        self.model_dir = None
        self.model_config = model_config
        self.dataset_config = dataset_config
        self.paired = 'paired' in dataset_config['nameOfDataset']
        self.input_types = model_config['inputDataTypes']
        self.output_types = model_config['outputDataTypes']
        self.seq_lenght = sequence_length
        self.input_shape = input_shape
        self.output_shape = output_shape
        self.output_index = len(self.input_types)
        self.fid_metric_frame = None
        self.kid_metric_frame = None
        self.skvd_metric_frame = None

    def setModelDir(self, model_dir):
        # Metric objects (FID/KID/SKVD) are external models; not instantiated here.
        self.model_dir = model_dir

    def forward(self, data, fake_data=(), sub_nets_name=()):
        # data: NCHW array (B, C, H, W).  The abstract forward defines no
        # compute; the faithful base semantics are an identity pass-through,
        # executed as a direct HBM->HBM DMA copy.  When embedded in a larger
        # jitted graph, prefer returning `data` unchanged instead (zero bytes
        # moved beats any roofline-perfect copy).
        return pallas_identity_copy(data)

    def discriminatorLossesToTrainList(self, losses):
        return [losses['loss']]

    def generatorLossesToTrainList(self, losses):
        return [losses['loss']]

    def getSummary(self, data, model_values, pred, mode):
        return model_values


if __name__ == "__main__":
    key = jax.random.PRNGKey(0)

    # Small shapes consistent with the module's NCHW convention.
    B, C, H, W = 2, 4, 16, 16
    x = jax.random.normal(key, (B, C, H, W), dtype=jnp.float32)

    model_config = {
        'inputDataTypes': ['frame', 'segmentation'],
        'outputDataTypes': ['frame'],
    }
    dataset_config = {'nameOfDataset': 'synthetic_paired_dataset'}

    model = BaseModel(
        model_config=model_config,
        dataset_config=dataset_config,
        input_shape=(B, C, H, W),
        output_shape=(B, C, H, W),
        sequence_length=1,
    )
    model.setModelDir("/tmp/unused")  # no file I/O happens

    y = model.forward(x)
    y = jax.block_until_ready(y)

    # Sanity: identity semantics of the abstract base forward.
    assert y.shape == x.shape and y.dtype == x.dtype
    assert bool(jnp.all(y == x))
    assert model.paired is True
    assert model.output_index == 2

    # Robustness: non-128-divisible, sub-32-bit NCHW input (e.g. C=3 frames).
    x_odd = jax.random.normal(key, (1, 3, 15, 17), dtype=jnp.bfloat16)
    y_odd = jax.block_until_ready(model.forward(x_odd))
    assert y_odd.shape == x_odd.shape and y_odd.dtype == x_odd.dtype
    assert bool(jnp.all(y_odd == x_odd))

    print("KERNEL_OK")
</pallas_src>

<mosaic_0001>
module attributes {stable_mosaic.version = 11 : i64} {
  func.func @kernel(%arg0: memref<2x4x16x16xf32, #tpu.memory_space<any>>, %arg1: memref<2x4x16x16xf32, #tpu.memory_space<any>>, %arg2: memref<1x!tpu.dma_semaphore, #tpu.memory_space<semaphore_mem>>) attributes {dimension_semantics = [], scalar_prefetch = 0 : i64, scratch_operands = 1 : i64, tpu.core_type = #tpu.core_type<tc>} {
    %c0_i32 = arith.constant 0 : i32
    %c0_i32_0 = arith.constant 0 : i32
    %c0_i32_1 = arith.constant 0 : i32
    %c0_i32_2 = arith.constant 0 : i32
    %c0_i32_3 = arith.constant 0 : i32
    %0 = tpu.memref_slice %arg0[%c0_i32_0, %c0_i32_1, %c0_i32_2, %c0_i32_3] : memref<2x4x16x16xf32, #tpu.memory_space<any>> -> memref<2x4x16x16xf32, #tpu.memory_space<any>>
    %c0_i32_4 = arith.constant 0 : i32
    %c0_i32_5 = arith.constant 0 : i32
    %c0_i32_6 = arith.constant 0 : i32
    %c0_i32_7 = arith.constant 0 : i32
    %1 = tpu.memref_slice %arg1[%c0_i32_4, %c0_i32_5, %c0_i32_6, %c0_i32_7] : memref<2x4x16x16xf32, #tpu.memory_space<any>> -> memref<2x4x16x16xf32, #tpu.memory_space<any>>
    %2 = tpu.memref_slice %arg2[%c0_i32] : memref<1x!tpu.dma_semaphore, #tpu.memory_space<semaphore_mem>> -> memref<1x!tpu.dma_semaphore, #tpu.memory_space<semaphore_mem>>
    %3 = tpu.memref_squeeze %2 : memref<1x!tpu.dma_semaphore, #tpu.memory_space<semaphore_mem>> -> memref<!tpu.dma_semaphore, #tpu.memory_space<semaphore_mem>>
    tpu.enqueue_dma source(%0 : memref<2x4x16x16xf32, #tpu.memory_space<any>>) target(%1 : memref<2x4x16x16xf32, #tpu.memory_space<any>>) target_semaphore(%3 : memref<!tpu.dma_semaphore, #tpu.memory_space<semaphore_mem>>)
    %c0_i32_8 = arith.constant 0 : i32
    %c0_i32_9 = arith.constant 0 : i32
    %c0_i32_10 = arith.constant 0 : i32
    %c0_i32_11 = arith.constant 0 : i32
    %c0_i32_12 = arith.constant 0 : i32
    %4 = tpu.memref_slice %arg0[%c0_i32_9, %c0_i32_10, %c0_i32_11, %c0_i32_12] : memref<2x4x16x16xf32, #tpu.memory_space<any>> -> memref<2x4x16x16xf32, #tpu.memory_space<any>>
    %c0_i32_13 = arith.constant 0 : i32
    %c0_i32_14 = arith.constant 0 : i32
    %c0_i32_15 = arith.constant 0 : i32
    %c0_i32_16 = arith.constant 0 : i32
    %5 = tpu.memref_slice %arg1[%c0_i32_13, %c0_i32_14, %c0_i32_15, %c0_i32_16] : memref<2x4x16x16xf32, #tpu.memory_space<any>> -> memref<2x4x16x16xf32, #tpu.memory_space<any>>
    %6 = tpu.memref_slice %arg2[%c0_i32_8] : memref<1x!tpu.dma_semaphore, #tpu.memory_space<semaphore_mem>> -> memref<1x!tpu.dma_semaphore, #tpu.memory_space<semaphore_mem>>
    %7 = tpu.memref_squeeze %6 : memref<1x!tpu.dma_semaphore, #tpu.memory_space<semaphore_mem>> -> memref<!tpu.dma_semaphore, #tpu.memory_space<semaphore_mem>>
    tpu.wait_dma2 semaphore(%7 : memref<!tpu.dma_semaphore, #tpu.memory_space<semaphore_mem>>) src(%4 : memref<2x4x16x16xf32, #tpu.memory_space<any>>) dst(%5 : memref<2x4x16x16xf32, #tpu.memory_space<any>>)
    return
  }
}

</mosaic_0001>

<llo_original>
// kernel: tpu_custom_call.1
$region0: #{tpu_custom_call.1}
  #allocation0 [shape = 'u32[]', space=smem, size = 0x4, offset = 0x4, fixed_abs, tag = 'smem constant byte address 0x4 - core index']
  #allocation1 [shape = 'u32[144,128]{1,0:T(1,128)}', space=vmem, size = 0x12000, scoped, tag = 'internal scratch']
  #allocation2 [shape = 's32[1]{0}', space=sflag, size = 0x4, scoped, tag = 'scratch operand']
  #allocation3 [shape = 's32[]', space=sflag, size = 0x4, offset = 0, fixed_abs, tag = 'sflag constant byte address 0x0 - dummy sync flag']
  #allocation4 [shape = 'u32[0]{0}', space=smem, size = 0, offset = 0, fixed_abs, tag = 'smem constant byte address 0x0 - null']
  %s0 = inlined_call_operand.hbm [shape: f32[2,4,16,16], index: 0, kind: input, shape index: {}]
  %s1 = inlined_call_operand.hbm [shape: f32[2,4,16,16], index: 1, kind: output, shape index: {}]
  %s2 = sld [smem:[#allocation0]]
  $region2: #{tpu_custom_call.1} parent=0
    _
  %s4 = ssub.s32 1, %s2
  %s5 = scalar_select 0, %s4, %s2
  %s7 = sshll.u32 1, 14
  %s8 = sxor.u32 4294967295, %s7
  %s11 = sshll.u32 3, 24
  %s12 = sxor.u32 4294967295, %s11
  %s13 = sand.u32 0, %s12
  %s15 = sor.u32 %s13, 0
  %18 = dma.general %s0, 2048, %s1, [#allocation2], [#allocation3], [#allocation4], %s15, 0
  %s19 = smul.u32 2, 4
  %s20 = smul.u32 %s19, 16
  %s21 = smul.u32 %s20, 1
  %s22 = sshll.u32 %s21, 4
  %23 = dma.done [#allocation2], %s22
  %24 = vsyncmov [#allocation2]
  %s25 = vpop.sfrf %24
  %p26 = scmp.eq.s32.totalorder %s25, 0
  %p27 = pneg %p26
  %29 = shalt.err (%p27)

</llo_original>
